<compile_context>
chip_gen: v7x
topology: tpu7x:2x2x1
jax: 0.10.0
libtpu: 0.0.40
codegen_flags: <defaults>
</compile_context>

<pallas_src>
import functools

import jax
import jax.numpy as jnp
from jax import lax
from jax.experimental import pallas as pl
from jax.experimental.pallas import tpu as pltpu


def _vmem_capacity_bytes():
    """Physical VMEM per TensorCore; conservative 64 MiB (v7x) fallback."""
    try:
        cap = int(pltpu.get_tpu_info().vmem_capacity_bytes)
        if cap > 0:
            return cap
    except Exception:
        pass
    return 64 << 20


def _ls_ce_kernel(x_ref, t_ref, o_ref, *, ignore_index, n_rows):
    j = pl.program_id(0)            # row-block step ("arbitrary")

    @pl.when(j == 0)
    def _():
        # o_ref is resident across the whole grid (constant block index);
        # rows: 0 = smoothing sum, 1 = NLL sum, 2 = valid-target count.
        o_ref[...] = jnp.zeros_like(o_ref)

    # Compute in f32 regardless of input dtype (v5e has no bf16 VPU/EUP).
    logits = x_ref[...].astype(jnp.float32)   # (bn, C)
    tgt = t_ref[...]                          # (bn, 1) int32
    bn, c = logits.shape

    # Global row index of each tile row -> mask out padding rows.
    row0 = j * bn
    local = lax.broadcasted_iota(jnp.int32, (bn, 1), 0)
    row_valid = (row0 + local) < n_rows       # (bn, 1) bool

    # Numerically stable pieces of log-softmax; logp itself is never built.
    m = jnp.max(logits, axis=-1, keepdims=True)          # (bn, 1)
    shifted = logits - m                                  # (bn, C)
    lse = jnp.log(jnp.sum(jnp.exp(shifted), axis=-1, keepdims=True))  # (bn, 1)

    # Smoothing term per row: -sum_c logp = C*lse - sum_c(shifted).
    # Both terms are non-negative, so no cancellation.
    sum_shifted = jnp.sum(shifted, axis=-1, keepdims=True)
    smooth_rows = jnp.where(row_valid, c * lse - sum_shifted, 0.0)

    # NLL term per row: -logp[i, t_i] = lse - shifted[i, t_i] via one-hot
    # select on `shifted` (VPU-friendly), masked by ignore_index & padding.
    col = lax.broadcasted_iota(jnp.int32, (bn, c), 1)
    picked_shifted = jnp.sum(jnp.where(col == tgt, shifted, 0.0),
                             axis=-1, keepdims=True)
    valid_t = jnp.logical_and(tgt != ignore_index, row_valid)
    nll_rows = jnp.where(valid_t, lse - picked_shifted, 0.0)

    # Per-step reduction to scalars, accumulated into a lane-dense resident
    # (3, 8, 128) block (every element of a row holds the same running sum).
    o_ref[0] += jnp.sum(smooth_rows)
    o_ref[1] += jnp.sum(nll_rows)
    o_ref[2] += jnp.sum(valid_t.astype(jnp.float32))


def label_smoothing_cross_entropy(logits, target, *, eps=0.1, reduction='mean',
                                  ignore_index=-100, block_n=None):
    """Pallas equivalent of LabelSmoothingCrossEntropy()(logits, target)."""
    n, c = logits.shape
    itemsize = jnp.dtype(logits.dtype).itemsize
    # Sublane multiple for the input dtype: 8 (f32), 16 (bf16), 32 (int8).
    sub = 8 * max(1, 4 // itemsize)

    vmem_cap = _vmem_capacity_bytes()

    if block_n is None:
        # Double-buffered working set per row: logits row + lane-padded
        # (1 -> 128 lanes) int32 target row in VMEM.  Use ~1/4 of physical
        # VMEM for the in-flight tiles (~32 MiB on v5e/v6e, ~16 MiB on v7x).
        row_bytes = c * itemsize + 128 * 4
        budget = vmem_cap // 4
        block_n = budget // (2 * row_bytes)
        block_n = max(sub, min(8192, (block_n // sub) * sub))
    else:
        block_n = max(sub, (int(block_n) + sub - 1) // sub * sub)

    # Never make the tile larger than the (sublane-padded) row count.
    block_n = min(block_n, -(-n // sub) * sub)
    steps = -(-n // block_n)
    n_pad = steps * block_n

    x = logits                                   # native dtype, no host upcast
    t = target.astype(jnp.int32).reshape(n, 1)
    if n_pad != n:
        x = jnp.pad(x, ((0, n_pad - n), (0, 0)))
        t = jnp.pad(t, ((0, n_pad - n), (0, 0)), constant_values=ignore_index)

    kernel = functools.partial(_ls_ce_kernel,
                               ignore_index=int(ignore_index), n_rows=n)

    # VMEM budget: double-buffered logits + lane-padded target tiles plus the
    # tiny resident output block; cap the scoped limit at ~3/4 of physical
    # VMEM (≈96 MiB on v5e/v6e's 128 MiB, ≈48 MiB on v7x's 64 MiB).
    vmem_est = (2 * block_n * c * itemsize        # logits tiles
                + 2 * block_n * 128 * 4           # target tiles (lane-padded)
                + 3 * 8 * 128 * 4)                # resident output block
    vmem_limit = int(min(max(2 * vmem_est + (2 << 20), 32 << 20),
                         (vmem_cap * 3) // 4))

    cost = pl.CostEstimate(
        flops=int(8 * n_pad * c),
        transcendentals=int(n_pad * c),
        bytes_accessed=int(n_pad * c * itemsize + n_pad * 4 + 3 * 8 * 128 * 4))

    partials = pl.pallas_call(
        kernel,
        out_shape=jax.ShapeDtypeStruct((3, 8, 128), jnp.float32),
        grid_spec=pltpu.PrefetchScalarGridSpec(
            num_scalar_prefetch=0,
            grid=(steps,),
            in_specs=[
                pl.BlockSpec((block_n, c), lambda j: (j, 0)),
                pl.BlockSpec((block_n, 1), lambda j: (j, 0)),
            ],
            out_specs=pl.BlockSpec((3, 8, 128), lambda j: (0, 0, 0)),
        ),
        compiler_params=pltpu.CompilerParams(
            dimension_semantics=("arbitrary",),
            vmem_limit_bytes=vmem_limit),
        cost_estimate=cost,
    )(x, t)

    smooth = partials[0, 0, 0]
    nll = partials[1, 0, 0]
    cnt = partials[2, 0, 0]

    if reduction == 'mean':
        smooth_term = smooth / float(n)          # mean over ALL rows
        # NOTE: like torch.nn.functional.nll_loss, this yields NaN if every
        # target equals ignore_index (cnt == 0) — intentional parity.
        nll_term = nll / cnt                     # mean over non-ignored rows
    else:  # 'sum'
        smooth_term = smooth
        nll_term = nll
    return smooth_term * (eps / c) + (1.0 - eps) * nll_term


def _reference(logits, target, eps=0.1, ignore_index=-100, reduction='mean'):
    """Pure-JAX reference matching the PyTorch module."""
    c = logits.shape[-1]
    logp = jax.nn.log_softmax(logits.astype(jnp.float32), axis=-1)
    valid = target != ignore_index
    safe_t = jnp.where(valid, target, 0)
    picked = jnp.take_along_axis(logp, safe_t[:, None], axis=-1)[:, 0]
    nll_rows = jnp.where(valid, -picked, 0.0)
    if reduction == 'sum':
        smooth = -logp.sum()
        nll = nll_rows.sum()
    else:  # 'mean'
        smooth = (-logp.sum(axis=-1)).mean()
        nll = nll_rows.sum() / jnp.sum(valid)
    return smooth * eps / c + (1.0 - eps) * nll


if __name__ == "__main__":
    key = jax.random.PRNGKey(0)
    k1, k2, k3, k4, k5, k6 = jax.random.split(key, 6)

    # Case 1: small synthetic shapes, reduction='mean', one ignored row.
    N, C = 16, 32
    logits = jax.random.normal(k1, (N, C), dtype=jnp.float32)
    target = jax.random.randint(k2, (N,), 0, C, dtype=jnp.int32)
    target = target.at[0].set(-100)

    loss = label_smoothing_cross_entropy(logits, target, eps=0.1,
                                         reduction='mean', ignore_index=-100)
    loss = jax.block_until_ready(loss)
    ref = _reference(logits, target, eps=0.1, ignore_index=-100,
                     reduction='mean')
    assert jnp.allclose(loss, ref, rtol=1e-5, atol=1e-5), (loss, ref)

    # Case 2: reduction='sum', N not a multiple of 8 (exercises row padding).
    N2 = 20
    logits2 = jax.random.normal(k3, (N2, C), dtype=jnp.float32)
    target2 = jax.random.randint(k4, (N2,), 0, C, dtype=jnp.int32)
    target2 = target2.at[3].set(-100)

    loss2 = jax.block_until_ready(
        label_smoothing_cross_entropy(logits2, target2, eps=0.1,
                                      reduction='sum', ignore_index=-100))
    ref2 = _reference(logits2, target2, eps=0.1, ignore_index=-100,
                      reduction='sum')
    assert jnp.allclose(loss2, ref2, rtol=1e-5, atol=1e-5), (loss2, ref2)

    # Case 3: bf16 logits, forced small block_n -> multi-step accumulation
    # across the grid plus row padding (exercises the bf16 sublane=16 path).
    N3, C3 = 200, 128
    logits3 = jax.random.normal(k5, (N3, C3), dtype=jnp.bfloat16)
    target3 = jax.random.randint(k6, (N3,), 0, C3, dtype=jnp.int32)

    loss3 = jax.block_until_ready(
        label_smoothing_cross_entropy(logits3, target3, eps=0.1,
                                      reduction='mean', ignore_index=-100,
                                      block_n=64))
    ref3 = _reference(logits3, target3, eps=0.1, ignore_index=-100,
                      reduction='mean')
    assert jnp.allclose(loss3, ref3, rtol=1e-4, atol=1e-4), (loss3, ref3)

    print("KERNEL_OK")
</pallas_src>

<mosaic_0001>
module attributes {stable_mosaic.version = 11 : i64} {
  func.func @_ls_ce_kernel(%arg0: i32, %arg1: memref<16x32xf32, #tpu.memory_space<vmem>>, %arg2: memref<16x1xi32, #tpu.memory_space<vmem>>, %arg3: memref<3x8x128xf32, #tpu.memory_space<vmem>>) attributes {dimension_semantics = [#tpu.dimension_semantics<arbitrary>], iteration_bounds = array<i64: 1>, scalar_prefetch = 0 : i64, scratch_operands = 0 : i64, tpu.core_type = #tpu.core_type<tc>, window_params = [{transform_indices = @transform_0, window_bounds = array<i64: 16, 32>}, {transform_indices = @transform_1, window_bounds = array<i64: 16, 1>}, {pipeline_mode = #tpu.pipeline_mode<synchronous>, transform_indices = @transform_2, window_bounds = array<i64: 3, 8, 128>}]} {
    %c0_i32 = arith.constant 0 : i32
    %0 = arith.cmpi eq, %arg0, %c0_i32 : i32
    %1 = arith.extui %0 : i1 to i32
    %c0_i32_0 = arith.constant 0 : i32
    %2 = arith.cmpi ne, %1, %c0_i32_0 : i32
    scf.if %2 {
      %cst_31 = arith.constant 0.000000e+00 : f32
      %74 = vector.broadcast %cst_31 : f32 to vector<3x8x128xf32>
      %c0_32 = arith.constant 0 : index
      %c0_33 = arith.constant 0 : index
      %c0_34 = arith.constant 0 : index
      %75 = vector.load %arg3[%c0_32, %c0_33, %c0_34] : memref<3x8x128xf32, #tpu.memory_space<vmem>>, vector<3x8x128xf32>
      tpu.vector_store %arg3[%c0_32, %c0_33, %c0_34], %74 {strides = array<i32>} : memref<3x8x128xf32, #tpu.memory_space<vmem>>, vector<3x8x128xf32>,
    } else {
    }
    %c0 = arith.constant 0 : index
    %c0_1 = arith.constant 0 : index
    %3 = vector.load %arg1[%c0, %c0_1] : memref<16x32xf32, #tpu.memory_space<vmem>>, vector<16x32xf32>
    %c0_2 = arith.constant 0 : index
    %c0_3 = arith.constant 0 : index
    %4 = vector.load %arg2[%c0_2, %c0_3] : memref<16x1xi32, #tpu.memory_space<vmem>>, vector<16x1xi32>
    %c16_i32 = arith.constant 16 : i32
    %5 = arith.muli %arg0, %c16_i32 : i32
    %6 = tpu.iota {dimensions = array<i32: 0>} : vector<16x1xi32>
    %7 = vector.broadcast %5 : i32 to vector<16x1xi32>
    %8 = arith.addi %7, %6 : vector<16x1xi32>
    %c16_i32_4 = arith.constant 16 : i32
    %9 = vector.broadcast %c16_i32_4 : i32 to vector<16x1xi32>
    %10 = arith.cmpi slt, %8, %9 : vector<16x1xi32>
    %cst = arith.constant dense<0xFF800000> : vector<16xf32>
    %11 = vector.multi_reduction <maximumf>, %3, %cst [1] : vector<16x32xf32> to vector<16xf32>
    %12 = vector.shape_cast %11 : vector<16xf32> to vector<16x1xf32>
    %13 = vector.broadcast %12 : vector<16x1xf32> to vector<16x32xf32>
    %14 = arith.subf %3, %13 : vector<16x32xf32>
    %15 = math.exp %14 : vector<16x32xf32>
    %cst_5 = arith.constant dense<0.000000e+00> : vector<16xf32>
    %16 = vector.multi_reduction <add>, %15, %cst_5 [1] : vector<16x32xf32> to vector<16xf32>
    %17 = vector.shape_cast %16 : vector<16xf32> to vector<16x1xf32>
    %18 = math.log %17 : vector<16x1xf32>
    %cst_6 = arith.constant dense<0.000000e+00> : vector<16xf32>
    %19 = vector.multi_reduction <add>, %14, %cst_6 [1] : vector<16x32xf32> to vector<16xf32>
    %20 = vector.shape_cast %19 : vector<16xf32> to vector<16x1xf32>
    %cst_7 = arith.constant 3.200000e+01 : f32
    %21 = vector.broadcast %cst_7 : f32 to vector<16x1xf32>
    %22 = arith.mulf %21, %18 : vector<16x1xf32>
    %23 = arith.subf %22, %20 : vector<16x1xf32>
    %cst_8 = arith.constant 0.000000e+00 : f32
    %24 = vector.broadcast %cst_8 : f32 to vector<16x1xf32>
    %25 = arith.select %10, %23, %24 : vector<16x1xi1>, vector<16x1xf32>
    %26 = tpu.iota {dimensions = array<i32: 1>} : vector<16x32xi32>
    %27 = vector.broadcast %4 : vector<16x1xi32> to vector<16x32xi32>
    %28 = arith.cmpi eq, %26, %27 : vector<16x32xi32>
    %cst_9 = arith.constant 0.000000e+00 : f32
    %29 = vector.broadcast %cst_9 : f32 to vector<16x32xf32>
    %30 = arith.select %28, %14, %29 : vector<16x32xi1>, vector<16x32xf32>
    %cst_10 = arith.constant dense<0.000000e+00> : vector<16xf32>
    %31 = vector.multi_reduction <add>, %30, %cst_10 [1] : vector<16x32xf32> to vector<16xf32>
    %32 = vector.shape_cast %31 : vector<16xf32> to vector<16x1xf32>
    %c-100_i32 = arith.constant -100 : i32
    %33 = vector.broadcast %c-100_i32 : i32 to vector<16x1xi32>
    %34 = arith.cmpi ne, %4, %33 : vector<16x1xi32>
    %35 = arith.andi %34, %10 : vector<16x1xi1>
    %36 = arith.subf %18, %32 : vector<16x1xf32>
    %cst_11 = arith.constant 0.000000e+00 : f32
    %37 = vector.broadcast %cst_11 : f32 to vector<16x1xf32>
    %38 = arith.select %35, %36, %37 : vector<16x1xi1>, vector<16x1xf32>
    %c0_12 = arith.constant 0 : index
    %c0_13 = arith.constant 0 : index
    %c0_14 = arith.constant 0 : index
    %39 = vector.load %arg3[%c0_12, %c0_13, %c0_14] : memref<3x8x128xf32, #tpu.memory_space<vmem>>, vector<1x8x128xf32>
    %40 = vector.shape_cast %39 : vector<1x8x128xf32> to vector<8x128xf32>
    %41 = vector.shape_cast %25 : vector<16x1xf32> to vector<1x16x1xf32>
    %cst_15 = arith.constant dense<0.000000e+00> : vector<1xf32>
    %42 = vector.multi_reduction <add>, %41, %cst_15 [1, 2] : vector<1x16x1xf32> to vector<1xf32>
    %43 = vector.shape_cast %42 : vector<1xf32> to vector<1x1x1xf32>
    %44 = vector.extract %43[0, 0, 0] : f32 from vector<1x1x1xf32>
    %45 = vector.broadcast %44 : f32 to vector<8x128xf32>
    %46 = arith.addf %40, %45 : vector<8x128xf32>
    %c0_16 = arith.constant 0 : index
    %c0_17 = arith.constant 0 : index
    %c0_18 = arith.constant 0 : index
    %47 = vector.load %arg3[%c0_16, %c0_17, %c0_18] : memref<3x8x128xf32, #tpu.memory_space<vmem>>, vector<1x8x128xf32>
    %48 = vector.shape_cast %47 : vector<1x8x128xf32> to vector<8x128xf32>
    %49 = vector.shape_cast %46 : vector<8x128xf32> to vector<1x8x128xf32>
    tpu.vector_store %arg3[%c0_16, %c0_17, %c0_18], %49 {strides = array<i32>} : memref<3x8x128xf32, #tpu.memory_space<vmem>>, vector<1x8x128xf32>,
    %c1 = arith.constant 1 : index
    %c0_19 = arith.constant 0 : index
    %c0_20 = arith.constant 0 : index
    %50 = vector.load %arg3[%c1, %c0_19, %c0_20] : memref<3x8x128xf32, #tpu.memory_space<vmem>>, vector<1x8x128xf32>
    %51 = vector.shape_cast %50 : vector<1x8x128xf32> to vector<8x128xf32>
    %52 = vector.shape_cast %38 : vector<16x1xf32> to vector<1x16x1xf32>
    %cst_21 = arith.constant dense<0.000000e+00> : vector<1xf32>
    %53 = vector.multi_reduction <add>, %52, %cst_21 [1, 2] : vector<1x16x1xf32> to vector<1xf32>
    %54 = vector.shape_cast %53 : vector<1xf32> to vector<1x1x1xf32>
    %55 = vector.extract %54[0, 0, 0] : f32 from vector<1x1x1xf32>
    %56 = vector.broadcast %55 : f32 to vector<8x128xf32>
    %57 = arith.addf %51, %56 : vector<8x128xf32>
    %c1_22 = arith.constant 1 : index
    %c0_23 = arith.constant 0 : index
    %c0_24 = arith.constant 0 : index
    %58 = vector.load %arg3[%c1_22, %c0_23, %c0_24] : memref<3x8x128xf32, #tpu.memory_space<vmem>>, vector<1x8x128xf32>
    %59 = vector.shape_cast %58 : vector<1x8x128xf32> to vector<8x128xf32>
    %60 = vector.shape_cast %57 : vector<8x128xf32> to vector<1x8x128xf32>
    tpu.vector_store %arg3[%c1_22, %c0_23, %c0_24], %60 {strides = array<i32>} : memref<3x8x128xf32, #tpu.memory_space<vmem>>, vector<1x8x128xf32>,
    %c2 = arith.constant 2 : index
    %c0_25 = arith.constant 0 : index
    %c0_26 = arith.constant 0 : index
    %61 = vector.load %arg3[%c2, %c0_25, %c0_26] : memref<3x8x128xf32, #tpu.memory_space<vmem>>, vector<1x8x128xf32>
    %62 = vector.shape_cast %61 : vector<1x8x128xf32> to vector<8x128xf32>
    %63 = arith.extui %35 : vector<16x1xi1> to vector<16x1xi32>
    %64 = arith.sitofp %63 : vector<16x1xi32> to vector<16x1xf32>
    %65 = vector.shape_cast %64 : vector<16x1xf32> to vector<1x16x1xf32>
    %cst_27 = arith.constant dense<0.000000e+00> : vector<1xf32>
    %66 = vector.multi_reduction <add>, %65, %cst_27 [1, 2] : vector<1x16x1xf32> to vector<1xf32>
    %67 = vector.shape_cast %66 : vector<1xf32> to vector<1x1x1xf32>
    %68 = vector.extract %67[0, 0, 0] : f32 from vector<1x1x1xf32>
    %69 = vector.broadcast %68 : f32 to vector<8x128xf32>
    %70 = arith.addf %62, %69 : vector<8x128xf32>
    %c2_28 = arith.constant 2 : index
    %c0_29 = arith.constant 0 : index
    %c0_30 = arith.constant 0 : index
    %71 = vector.load %arg3[%c2_28, %c0_29, %c0_30] : memref<3x8x128xf32, #tpu.memory_space<vmem>>, vector<1x8x128xf32>
    %72 = vector.shape_cast %71 : vector<1x8x128xf32> to vector<8x128xf32>
    %73 = vector.shape_cast %70 : vector<8x128xf32> to vector<1x8x128xf32>
    tpu.vector_store %arg3[%c2_28, %c0_29, %c0_30], %73 {strides = array<i32>} : memref<3x8x128xf32, #tpu.memory_space<vmem>>, vector<1x8x128xf32>,
    return
  }
  func.func @transform_0(%arg0: i32) -> (i32, i32) {
    %c0_i32 = arith.constant 0 : i32
    %c0_i32_0 = arith.constant 0 : i32
    return %arg0, %c0_i32 : i32, i32
  }
  func.func @transform_1(%arg0: i32) -> (i32, i32) {
    %c0_i32 = arith.constant 0 : i32
    %c0_i32_0 = arith.constant 0 : i32
    return %arg0, %c0_i32 : i32, i32
  }
  func.func @transform_2(%arg0: i32) -> (i32, i32, i32) {
    %c0_i32 = arith.constant 0 : i32
    %c0_i32_0 = arith.constant 0 : i32
    %c0_i32_1 = arith.constant 0 : i32
    %c0_i32_2 = arith.constant 0 : i32
    return %c0_i32, %c0_i32_0, %c0_i32_1 : i32, i32, i32
  }
}

</mosaic_0001>

<llo_original>
// kernel: tpu_custom_call.1
$region0: #{tpu_custom_call.1}
  #allocation0 [shape = 'u32[]', space=smem, size = 0x4, offset = 0x4, fixed_abs, tag = 'smem constant byte address 0x4 - core index']
  #allocation1 [shape = 'u32[144,128]{1,0:T(1,128)}', space=vmem, size = 0x12000, scoped, tag = 'internal scratch']
  %s0 = inlined_call_operand.vmem [shape: f32[16,32], index: 0, kind: input, shape index: {}]
  %s1 = inlined_call_operand.vmem [shape: s32[16,1], index: 1, kind: input, shape index: {}]
  %s2 = inlined_call_operand.hbm [shape: f32[3,8,128], index: 2, kind: output, shape index: {}]
  %s3 = sld [smem:[#allocation0]]
  $region22: #{tpu_custom_call.1} parent=0
    _
  %s5 = ssub.s32 1, %s3
  %s6 = scalar_select 0, %s5, %s3
  $region1: #{tpu_custom_call.1} parent=0
    #allocation2 [shape = 'u8[12288]{0}', space=vmem, size = 0x3000, scoped, tag = 'output window, operand 0, single buffered']
    #allocation3 [shape = 's32[1]{0}', space=sflag, size = 0x4, scoped, tag = 'scoped memory for tpu_custom_call.1']
    %7 = vsyncpa [#allocation3], 0
    // Predicated region
    $region2: #{tpu_custom_call.1} parent=1 // pred_check
      _
    $region3: #{tpu_custom_call.1} parent=1 // pred_check_branch
      %9 = sbr.rel (0) target = $region5
    $region4: #{tpu_custom_call.1} parent=1 // pred_region
      _
    $region5: #{tpu_custom_call.1} parent=1 // pred_fallthru
      _
    // Predicated region
    $region6: #{tpu_custom_call.1} parent=1 // pred_check
      _
    $region7: #{tpu_custom_call.1} parent=1 // pred_check_branch
      %11 = sbr.rel (0) target = $region9
    $region8: #{tpu_custom_call.1} parent=1 // pred_region
      _
    $region9: #{tpu_custom_call.1} parent=1 // pred_fallthru
      _
    %p12 = scmp.eq.s32.totalorder 0, 0
    // Predicated region
    $region10: #{tpu_custom_call.1} parent=1 // pred_check
      %p13 = pneg %p12
    $region11: #{tpu_custom_call.1} parent=1 // pred_check_branch
      %15 = sbr.rel (%p13) target = $region13
    $region12: #{tpu_custom_call.1} parent=1 // pred_region
      %16 = vst [vmem:[#allocation2] sm:$0xff] 0.0
      %17 = vst [vmem:[#allocation2 + $0x8] sm:$0xff] 0.0
      %18 = vst [vmem:[#allocation2 + $0x10] sm:$0xff] 0.0
    $region13: #{tpu_custom_call.1} parent=1 // pred_fallthru
      _
    %v19 = vld [vmem:[%s0] sm:$0xff]
    %v20 = vld [vmem:[%s0 + $0x8] sm:$0xff]
    %v21 = vld [vmem:[%s1] sm:$0xff]
    %v22 = vld [vmem:[%s1 + $0x8] sm:$0xff]
    %s23 = smul.u32 0, 16
    %v24 = vlaneseq
    %v25 = vshrl.u32 %v24, 7
    %v26 = vadd.s32 %v25, 8
    %v27 = vstv %s23
    %v28 = vadd.s32 %v27, %v25
    %v29 = vadd.s32 %v27, %v26
    %vm30 = vcmp.lt.s32.totalorder %v28, 16
    %vm31 = vcmp.lt.s32.totalorder %v29, 16
    %vm32 = vcmask 261120
    %v33 = vsel %vm32, %v19, -inf
    %34 = vmax.xlane.f32.xlu0 %v33
    %v35 = vpop.xlane.xlu0 %34
    %v36 = vsel %vm32, %v20, -inf
    %37 = vmax.xlane.f32.xlu0 %v36
    %v38 = vpop.xlane.xlu0 %37
    %v39 = vsub.f32 %v19, %v35
    %v40 = vsub.f32 %v20, %v38
    %v41 = vmul.f32 %v39, 1.442695
    %v42 = vpow.pop %v41
    %v43 = vmul.f32 %v40, 1.442695
    %v44 = vpow.pop %v43
    %v45 = vsel %vm32, %v42, 0.0
    %46 = vadd.xlane.f32.xlu0 %v45
    %v47 = vpop.xlane.xlu0 %46
    %v48 = vsel %vm32, %v44, 0.0
    %49 = vadd.xlane.f32.xlu0 %v48
    %v50 = vpop.xlane.xlu0 %49
    %v51 = vlog2.pop %v47
    %v52 = vmul.f32 %v51, 0.6931472
    %v53 = vlog2.pop %v50
    %v54 = vmul.f32 %v53, 0.6931472
    %v55 = vsel %vm32, %v39, 0.0
    %56 = vadd.xlane.f32.xlu0 %v55
    %v57 = vpop.xlane.xlu0 %56
    %v58 = vsel %vm32, %v40, 0.0
    %59 = vadd.xlane.f32.xlu0 %v58
    %v60 = vpop.xlane.xlu0 %59
    %v61 = vmul.f32 %v52, 32.0
    %v62 = vmul.f32 %v54, 32.0
    %v63 = vsub.f32 %v61, %v57
    %v64 = vsub.f32 %v62, %v60
    %v65 = vsel %vm30, %v63, 0.0
    %v66 = vsel %vm31, %v64, 0.0
    %v67 = vlaneseq
    %v68 = vand.u32 %v67, 127
    %69 = vset.pattern.permute.xlu0 0
    %70 = vperm.xlu0 %69, %v21
    %v71 = vpop.permute.xlu0 %70
    %72 = vset.pattern.permute.xlu0 0
    %73 = vperm.xlu0 %72, %v22
    %v74 = vpop.permute.xlu0 %73
    %vm75 = vcmp.eq.s32.totalorder %v68, %v71
    %vm76 = vcmp.eq.s32.totalorder %v68, %v74
    %v77 = vsel %vm75, %v39, 0.0
    %v78 = vsel %vm76, %v40, 0.0
    %v79 = vsel %vm32, %v77, 0.0
    %80 = vadd.xlane.f32.xlu0 %v79
    %v81 = vpop.xlane.xlu0 %80
    %v82 = vsel %vm32, %v78, 0.0
    %83 = vadd.xlane.f32.xlu0 %v82
    %v84 = vpop.xlane.xlu0 %83
    %vm85 = vcmp.ne.s32.totalorder %v21, 4294967196
    %vm86 = vcmp.ne.s32.totalorder %v22, 4294967196
    %vm87 = vmand %vm85, %vm30
    %vm88 = vmand %vm86, %vm31
    %v89 = vsub.f32 %v52, %v81
    %v90 = vsub.f32 %v54, %v84
    %v91 = vsel %vm87, %v89, 0.0
    %v92 = vsel %vm88, %v90, 0.0
    %v93 = vld [vmem:[#allocation2] sm:$0xff]
    %vm94 = vcmask 7168
    %v95 = vsel %vm94, %v65, 0.0
    %v96 = vsel %vm94, %v66, 0.0
    %v97 = vadd.f32 %v95, %v96
    %98 = vadd.xlane.f32.xlu0 %v97
    %v99 = vpop.xlane.xlu0 %98
    %v100 = vrot.slane %v99, 4
    %v101 = vadd.f32 %v99, %v100
    %v102 = vrot.slane %v101, 2
    %v103 = vadd.f32 %v101, %v102
    %v104 = vrot.slane %v103, 1
    %v105 = vadd.f32 %v103, %v104
    %s106 = vtos %v105
    %v107 = vstv %s106
    %v108 = vadd.f32 %v93, %v107
    %109 = vst [vmem:[#allocation2] sm:$0xff] %v108
    %s110 = scalar_lea.vmem [#allocation2], 8
    %v111 = vld [vmem:[%s110] sm:$0xff]
    %v112 = vsel %vm94, %v91, 0.0
    %v113 = vsel %vm94, %v92, 0.0
    %v114 = vadd.f32 %v112, %v113
    %115 = vadd.xlane.f32.xlu0 %v114
    %v116 = vpop.xlane.xlu0 %115
    %v117 = vrot.slane %v116, 4
    %v118 = vadd.f32 %v116, %v117
    %v119 = vrot.slane %v118, 2
    %v120 = vadd.f32 %v118, %v119
    %v121 = vrot.slane %v120, 1
    %v122 = vadd.f32 %v120, %v121
    %s123 = vtos %v122
    %v124 = vstv %s123
    %v125 = vadd.f32 %v111, %v124
    %126 = vst [vmem:[%s110] sm:$0xff] %v125
    %s127 = scalar_lea.vmem [#allocation2], 16
    %v128 = vld [vmem:[%s127] sm:$0xff]
    %v129 = vsel %vm87, 1, 0
    %v130 = vsel %vm88, 1, 0
    %v131 = vcvt.s32.f32 %v129
    %v132 = vcvt.s32.f32 %v130
    %v133 = vsel %vm94, %v131, 0.0
    %v134 = vsel %vm94, %v132, 0.0
    %v135 = vadd.f32 %v133, %v134
    %136 = vadd.xlane.f32.xlu0 %v135
    %v137 = vpop.xlane.xlu0 %136
    %v138 = vrot.slane %v137, 4
    %v139 = vadd.f32 %v137, %v138
    %v140 = vrot.slane %v139, 2
    %v141 = vadd.f32 %v139, %v140
    %v142 = vrot.slane %v141, 1
    %v143 = vadd.f32 %v141, %v142
    %s144 = vtos %v143
    %v145 = vstv %s144
    %v146 = vadd.f32 %v128, %v145
    %147 = vst [vmem:[%s127] sm:$0xff] %v146
    // Predicated region
    $region14: #{tpu_custom_call.1} parent=1 // pred_check
      _
    $region15: #{tpu_custom_call.1} parent=1 // pred_check_branch
      %149 = sbr.rel (0) target = $region17
    $region16: #{tpu_custom_call.1} parent=1 // pred_region
      %s151 = ssub.s32 384, 384
      %152 = vsyncadd [#allocation3], %s151
      %s153 = sshll.u32 [#allocation2], 4
      %s154 = int_to_ptr.vmem [resolvable:$true] %s153
      %159 = dma.vmem_to_hbm [thread:$0]  %s154, 384, %s2, [#allocation3], 128, 128, 8
    $region17: #{tpu_custom_call.1} parent=1 // pred_fallthru
      _
    // Predicated region
    $region18: #{tpu_custom_call.1} parent=1 // pred_check
      _
    $region19: #{tpu_custom_call.1} parent=1 // pred_check_branch
      %161 = sbr.rel (0) target = $region21
    $region20: #{tpu_custom_call.1} parent=1 // pred_region
      %162 = dma.done [#allocation3], 384
    $region21: #{tpu_custom_call.1} parent=1 // pred_fallthru
      _
    %163 = vsyncpa [#allocation3], 1

</llo_original>
